<compile_context>
chip_gen: v7x
topology: tpu7x:2x2x1
jax: 0.10.0
libtpu: 0.0.40
codegen_flags: <defaults>
</compile_context>

<pallas_src>
import math
from functools import partial

import jax
import jax.numpy as jnp
from jax import lax
from jax.experimental import pallas as pl
from jax.experimental.pallas import tpu as pltpu


def _pick_tile(n, target):
    """Largest tile <= target that divides n (halving fallback)."""
    t = min(target, n)
    while t > 1 and n % t != 0:
        t //= 2
    return max(t, 1)


def _vmem_limit(bytes_needed):
    # Leave headroom for Mosaic internal scratch; never claim more than 48 MiB
    # (a v7x TensorCore only has 64 MiB physical VMEM).
    return int(min(max(bytes_needed, 16 * 1024 * 1024), 48 * 1024 * 1024))


# --------------------- kernel 1: fused QKV projection ------------------------
def _qkv_proj_kernel(x_ref, w_ref, b_ref, *out_refs, q_scale, d_out):
    # One [tm, d_in] @ [d_in, n_proj*d_out] bf16 matmul (f32 accumulation),
    # bias add, then slice out the q/k/v columns (lane-aligned static slices).
    y = jnp.dot(x_ref[...], w_ref[...], preferred_element_type=jnp.float32)
    y = y + b_ref[...]
    for i, o_ref in enumerate(out_refs):
        blk = y[:, i * d_out:(i + 1) * d_out]
        if i == 0:
            blk = blk * q_scale          # fold softmax 1/sqrt(d_out) into q
        o_ref[...] = blk.astype(o_ref.dtype)


def qkv_projection(x, w_cat, b_cat, *, q_scale, d_out, n_proj, tm=256,
                   out_dtype=jnp.bfloat16):
    n, d_in = x.shape
    d_cat = w_cat.shape[1]
    assert d_cat == n_proj * d_out
    tm = _pick_tile(n, tm)
    assert n % tm == 0, "row count must be divisible by the row tile"

    # TODO(synk): for very large d_in/d_out add a d_out grid axis so the fused
    # weight block is tiled instead of held whole (matters on v7x 64 MiB VMEM).
    row = lambda i: (i, 0)
    full = lambda i: (0, 0)
    out_sds = tuple(jax.ShapeDtypeStruct((n, d_out), out_dtype)
                    for _ in range(n_proj))

    est = (2 * tm * d_in * x.dtype.itemsize            # x tile (double buf)
           + 2 * d_in * d_cat * w_cat.dtype.itemsize   # fused weights
           + d_cat * 4                                 # bias
           + 2 * n_proj * tm * d_out * jnp.dtype(out_dtype).itemsize
           + tm * d_cat * 4                            # f32 matmul result
           + (4 << 20))

    return pl.pallas_call(
        partial(_qkv_proj_kernel, q_scale=q_scale, d_out=d_out),
        out_shape=out_sds,
        grid_spec=pltpu.PrefetchScalarGridSpec(
            num_scalar_prefetch=0,
            grid=(n // tm,),
            in_specs=[
                pl.BlockSpec((tm, d_in), row),       # x row tile
                pl.BlockSpec((d_in, d_cat), full),   # fused Wq|Wk|Wv (resident)
                pl.BlockSpec((1, d_cat), full),      # fused bias
            ],
            out_specs=tuple(pl.BlockSpec((tm, d_out), row)
                            for _ in range(n_proj)),
        ),
        compiler_params=pltpu.CompilerParams(
            dimension_semantics=("parallel",),
            vmem_limit_bytes=_vmem_limit(est),
        ),
    )(x, w_cat, b_cat)


# ------------- kernel 2a: attention with K/V resident in VMEM ----------------
def _attn_resident_kernel(q_ref, k_ref, v_ref, o_ref, m_sc, l_sc, acc_sc, *, tk):
    num_kv = k_ref.shape[0] // tk

    m_sc[...] = jnp.full_like(m_sc, -jnp.inf)
    l_sc[...] = jnp.zeros_like(l_sc)
    acc_sc[...] = jnp.zeros_like(acc_sc)

    @pl.loop(0, num_kv)
    def _(j):
        start = pl.multiple_of(j * tk, tk)
        k_blk = k_ref[pl.ds(start, tk), :]
        v_blk = v_ref[pl.ds(start, tk), :]
        # Contract on the last dim of both operands: no K transpose/relayout.
        s = lax.dot_general(q_ref[...], k_blk, (((1,), (1,)), ((), ())),
                            preferred_element_type=jnp.float32)     # [TQ, TK]
        m_prev = m_sc[...]
        m_new = jnp.maximum(m_prev, s.max(axis=-1, keepdims=True))  # [TQ, 1]
        alpha = jnp.exp(m_prev - m_new)
        p = jnp.exp(s - m_new)
        l_sc[...] = alpha * l_sc[...] + p.sum(axis=-1, keepdims=True)
        acc_sc[...] = alpha * acc_sc[...] + jnp.dot(
            p.astype(v_blk.dtype), v_blk, preferred_element_type=jnp.float32)
        m_sc[...] = m_new

    o_ref[...] = (acc_sc[...] * pl.reciprocal(l_sc[...], approx=True)
                  ).astype(o_ref.dtype)


def _flash_attention_resident(q, k, v, *, tq, tk):
    n, d = q.shape
    itm = q.dtype.itemsize
    est = (2 * tq * d * itm            # q tile (double buffered)
           + 2 * 2 * n * d * itm       # K and V resident (+ pipeline slot)
           + 2 * tq * d * 4            # output tile f32
           + tq * d * 4 + 2 * tq * 4   # acc / m / l scratch
           + 2 * tq * tk * 4           # s / p temporaries
           + (4 << 20))
    return pl.pallas_call(
        partial(_attn_resident_kernel, tk=tk),
        out_shape=jax.ShapeDtypeStruct((n, d), jnp.float32),
        grid_spec=pltpu.PrefetchScalarGridSpec(
            num_scalar_prefetch=0,
            grid=(n // tq,),
            in_specs=[
                pl.BlockSpec((tq, d), lambda i: (i, 0)),   # q tile
                pl.BlockSpec((n, d), lambda i: (0, 0)),    # K: fetched once
                pl.BlockSpec((n, d), lambda i: (0, 0)),    # V: fetched once
            ],
            out_specs=pl.BlockSpec((tq, d), lambda i: (i, 0)),
            scratch_shapes=[
                pltpu.VMEM((tq, 1), jnp.float32),   # running max m
                pltpu.VMEM((tq, 1), jnp.float32),   # running denom l
                pltpu.VMEM((tq, d), jnp.float32),   # output accumulator
            ],
        ),
        compiler_params=pltpu.CompilerParams(
            dimension_semantics=("parallel",),
            vmem_limit_bytes=_vmem_limit(est),
        ),
    )(q, k, v)


# ------------- kernel 2b: tiled flash attention (K/V streamed) ---------------
def _flash_attn_tiled_kernel(q_ref, k_ref, v_ref, o_ref, m_sc, l_sc, acc_sc):
    kv = pl.program_id(1)

    @pl.when(kv == 0)
    def _():
        m_sc[...] = jnp.full_like(m_sc, -jnp.inf)
        l_sc[...] = jnp.zeros_like(l_sc)
        acc_sc[...] = jnp.zeros_like(acc_sc)

    s = lax.dot_general(q_ref[...], k_ref[...], (((1,), (1,)), ((), ())),
                        preferred_element_type=jnp.float32)          # [TQ, TK]
    m_prev = m_sc[...]
    m_new = jnp.maximum(m_prev, s.max(axis=-1, keepdims=True))
    alpha = jnp.exp(m_prev - m_new)
    p = jnp.exp(s - m_new)
    l_sc[...] = alpha * l_sc[...] + p.sum(axis=-1, keepdims=True)
    acc_sc[...] = alpha * acc_sc[...] + jnp.dot(
        p.astype(v_ref.dtype), v_ref[...], preferred_element_type=jnp.float32)
    m_sc[...] = m_new

    @pl.when(kv == pl.num_programs(1) - 1)
    def _():
        o_ref[...] = (acc_sc[...] * pl.reciprocal(l_sc[...], approx=True)
                      ).astype(o_ref.dtype)


def _flash_attention_tiled(q, k, v, *, tq, tk):
    n, d = q.shape
    itm = q.dtype.itemsize
    est = (2 * tq * d * itm + 2 * 2 * tk * d * itm + 2 * tq * d * 4
           + tq * d * 4 + 2 * tq * 4 + 2 * tq * tk * 4 + (4 << 20))
    return pl.pallas_call(
        _flash_attn_tiled_kernel,
        out_shape=jax.ShapeDtypeStruct((n, d), jnp.float32),
        grid_spec=pltpu.PrefetchScalarGridSpec(
            num_scalar_prefetch=0,
            grid=(n // tq, n // tk),
            in_specs=[
                pl.BlockSpec((tq, d), lambda qi, ki: (qi, 0)),
                pl.BlockSpec((tk, d), lambda qi, ki: (ki, 0)),
                pl.BlockSpec((tk, d), lambda qi, ki: (ki, 0)),
            ],
            out_specs=pl.BlockSpec((tq, d), lambda qi, ki: (qi, 0)),
            scratch_shapes=[
                pltpu.VMEM((tq, 1), jnp.float32),
                pltpu.VMEM((tq, 1), jnp.float32),
                pltpu.VMEM((tq, d), jnp.float32),
            ],
        ),
        compiler_params=pltpu.CompilerParams(
            dimension_semantics=("parallel", "arbitrary"),
            vmem_limit_bytes=_vmem_limit(est),
        ),
    )(q, k, v)


def flash_attention(q, k, v, *, tq=256, tk=256,
                    resident_kv_budget=24 * 1024 * 1024):
    n, d = q.shape
    tq = _pick_tile(n, tq)
    tk = _pick_tile(n, tk)
    # K+V residency cost including the pipeline's second buffer slot; the
    # 24 MiB default is safe on every generation (v7x TC: 64 MiB physical).
    kv_resident_bytes = 2 * (2 * n * d * q.dtype.itemsize)
    if kv_resident_bytes <= resident_kv_budget:
        return _flash_attention_resident(q, k, v, tq=tq, tk=tk)
    return _flash_attention_tiled(q, k, v, tq=tq, tk=tk)


# ------------------------------- module forward ------------------------------
def attention_forward(x, wq, bq, wk, bk, wv, bv, *, share_kv=False,
                      compute_dtype=jnp.bfloat16,
                      resident_kv_budget=24 * 1024 * 1024):
    """Pallas equivalent of Attention.forward(x)."""
    d_out = wq.shape[1]
    q_scale = 1.0 / math.sqrt(d_out)
    if share_kv:
        # v = self.k in the PyTorch module: skip the redundant V projection.
        w_cat = jnp.concatenate([wq, wk], axis=1)
        b_cat = jnp.concatenate([bq, bk], axis=1)
        n_proj = 2
    else:
        w_cat = jnp.concatenate([wq, wk, wv], axis=1)
        b_cat = jnp.concatenate([bq, bk, bv], axis=1)
        n_proj = 3

    outs = qkv_projection(x.astype(compute_dtype), w_cat.astype(compute_dtype),
                          b_cat.astype(jnp.float32),
                          q_scale=q_scale, d_out=d_out, n_proj=n_proj,
                          out_dtype=compute_dtype)
    if share_kv:
        q, k = outs
        v = k
    else:
        q, k, v = outs
    return flash_attention(q, k, v, resident_kv_budget=resident_kv_budget)


def _reference(x, wq, bq, wk, bk, wv, bv):
    q = x @ wq + bq
    k = x @ wk + bk
    v = x @ wv + bv
    s = (q @ k.T) / jnp.sqrt(jnp.float32(k.shape[1]))
    return jax.nn.softmax(s, axis=-1) @ v


if __name__ == "__main__":
    key = jax.random.PRNGKey(0)
    kx, kwq, kwk, kwv, kbq, kbk, kbv = jax.random.split(key, 7)

    # Small but lane-dense shapes (last dims multiples of 128).
    N, D_IN, D_OUT = 256, 128, 128

    x = jax.random.normal(kx, (N, D_IN), dtype=jnp.float32)
    wq = jax.random.normal(kwq, (D_IN, D_OUT), dtype=jnp.float32) / math.sqrt(D_IN)
    wk = jax.random.normal(kwk, (D_IN, D_OUT), dtype=jnp.float32) / math.sqrt(D_IN)
    wv = jax.random.normal(kwv, (D_IN, D_OUT), dtype=jnp.float32) / math.sqrt(D_IN)
    bq = 0.1 * jax.random.normal(kbq, (1, D_OUT), dtype=jnp.float32)
    bk = 0.1 * jax.random.normal(kbk, (1, D_OUT), dtype=jnp.float32)
    bv = 0.1 * jax.random.normal(kbv, (1, D_OUT), dtype=jnp.float32)

    ref = _reference(x, wq, bq, wk, bk, wv, bv)

    # bf16 intermediates -> loosened tolerance vs the f32 reference.
    TOL = dict(atol=5e-2, rtol=5e-2)

    # Default path: K/V resident in VMEM.
    out = jax.block_until_ready(attention_forward(x, wq, bq, wk, bk, wv, bv))
    assert out.shape == (N, D_OUT) and out.dtype == jnp.float32
    assert jnp.allclose(out, ref, **TOL), "resident-path mismatch vs reference"

    # Tiled fallback path (K/V streamed per kv step).
    out_tiled = jax.block_until_ready(
        attention_forward(x, wq, bq, wk, bk, wv, bv, resident_kv_budget=0))
    assert jnp.allclose(out_tiled, ref, **TOL), "tiled-path mismatch vs reference"

    # share_kv variant (v aliases k, V projection skipped).
    ref_skv = _reference(x, wq, bq, wk, bk, wk, bk)
    out_skv = jax.block_until_ready(
        attention_forward(x, wq, bq, wk, bk, wv, bv, share_kv=True))
    assert jnp.allclose(out_skv, ref_skv, **TOL), "share_kv mismatch vs reference"

    print("KERNEL_OK")
</pallas_src>

<mosaic_0001>
module attributes {stable_mosaic.version = 11 : i64} {
  func.func @_qkv_proj_kernel(%arg0: i32, %arg1: memref<256x128xbf16, #tpu.memory_space<vmem>>, %arg2: memref<128x384xbf16, #tpu.memory_space<vmem>>, %arg3: memref<1x384xf32, #tpu.memory_space<vmem>>, %arg4: memref<256x128xbf16, #tpu.memory_space<vmem>>, %arg5: memref<256x128xbf16, #tpu.memory_space<vmem>>, %arg6: memref<256x128xbf16, #tpu.memory_space<vmem>>) attributes {dimension_semantics = [#tpu.dimension_semantics<parallel>], iteration_bounds = array<i64: 1>, scalar_prefetch = 0 : i64, scratch_operands = 0 : i64, tpu.core_type = #tpu.core_type<tc>, window_params = [{transform_indices = @transform_0, window_bounds = array<i64: 256, 128>}, {pipeline_mode = #tpu.pipeline_mode<synchronous>, transform_indices = @transform_1, window_bounds = array<i64: 128, 384>}, {pipeline_mode = #tpu.pipeline_mode<synchronous>, transform_indices = @transform_2, window_bounds = array<i64: 1, 384>}, {transform_indices = @transform_3, window_bounds = array<i64: 256, 128>}, {transform_indices = @transform_4, window_bounds = array<i64: 256, 128>}, {transform_indices = @transform_5, window_bounds = array<i64: 256, 128>}]} {
    %c0 = arith.constant 0 : index
    %c0_0 = arith.constant 0 : index
    %0 = vector.load %arg1[%c0, %c0_0] : memref<256x128xbf16, #tpu.memory_space<vmem>>, vector<256x128xbf16>
    %c0_1 = arith.constant 0 : index
    %c0_2 = arith.constant 0 : index
    %1 = vector.load %arg2[%c0_1, %c0_2] : memref<128x384xbf16, #tpu.memory_space<vmem>>, vector<128x384xbf16>
    %cst = arith.constant dense<0.000000e+00> : vector<256x384xf32>
    %2 = tpu.matmul %0, %1, %cst {dimension_numbers = #tpu.dot_dimension_numbers<[1], [0], [0], [1], [0, 0, 1, 1], [], []>} : vector<256x128xbf16>, vector<128x384xbf16>, vector<256x384xf32> -> vector<256x384xf32>
    %c0_3 = arith.constant 0 : index
    %c0_4 = arith.constant 0 : index
    %3 = vector.load %arg3[%c0_3, %c0_4] : memref<1x384xf32, #tpu.memory_space<vmem>>, vector<1x384xf32>
    %4 = vector.broadcast %3 : vector<1x384xf32> to vector<256x384xf32>
    %5 = arith.addf %2, %4 : vector<256x384xf32>
    %6 = vector.extract_strided_slice %5 {offsets = [0, 0], sizes = [256, 128], strides = [1, 1]} : vector<256x384xf32> to vector<256x128xf32>
    %cst_5 = arith.constant 0.0883883461 : f32
    %7 = vector.broadcast %cst_5 : f32 to vector<256x128xf32>
    %8 = arith.mulf %6, %7 : vector<256x128xf32>
    %9 = arith.truncf %8 : vector<256x128xf32> to vector<256x128xbf16>
    %c0_6 = arith.constant 0 : index
    %c0_7 = arith.constant 0 : index
    %10 = vector.load %arg4[%c0_6, %c0_7] : memref<256x128xbf16, #tpu.memory_space<vmem>>, vector<256x128xbf16>
    tpu.vector_store %arg4[%c0_6, %c0_7], %9 {strides = array<i32>} : memref<256x128xbf16, #tpu.memory_space<vmem>>, vector<256x128xbf16>,
    %11 = vector.extract_strided_slice %5 {offsets = [0, 128], sizes = [256, 128], strides = [1, 1]} : vector<256x384xf32> to vector<256x128xf32>
    %12 = arith.truncf %11 : vector<256x128xf32> to vector<256x128xbf16>
    %c0_8 = arith.constant 0 : index
    %c0_9 = arith.constant 0 : index
    %13 = vector.load %arg5[%c0_8, %c0_9] : memref<256x128xbf16, #tpu.memory_space<vmem>>, vector<256x128xbf16>
    tpu.vector_store %arg5[%c0_8, %c0_9], %12 {strides = array<i32>} : memref<256x128xbf16, #tpu.memory_space<vmem>>, vector<256x128xbf16>,
    %14 = vector.extract_strided_slice %5 {offsets = [0, 256], sizes = [256, 128], strides = [1, 1]} : vector<256x384xf32> to vector<256x128xf32>
    %15 = arith.truncf %14 : vector<256x128xf32> to vector<256x128xbf16>
    %c0_10 = arith.constant 0 : index
    %c0_11 = arith.constant 0 : index
    %16 = vector.load %arg6[%c0_10, %c0_11] : memref<256x128xbf16, #tpu.memory_space<vmem>>, vector<256x128xbf16>
    tpu.vector_store %arg6[%c0_10, %c0_11], %15 {strides = array<i32>} : memref<256x128xbf16, #tpu.memory_space<vmem>>, vector<256x128xbf16>,
    return
  }
  func.func @transform_0(%arg0: i32) -> (i32, i32) {
    %c0_i32 = arith.constant 0 : i32
    %c0_i32_0 = arith.constant 0 : i32
    return %arg0, %c0_i32 : i32, i32
  }
  func.func @transform_1(%arg0: i32) -> (i32, i32) {
    %c0_i32 = arith.constant 0 : i32
    %c0_i32_0 = arith.constant 0 : i32
    %c0_i32_1 = arith.constant 0 : i32
    return %c0_i32, %c0_i32_0 : i32, i32
  }
  func.func @transform_2(%arg0: i32) -> (i32, i32) {
    %c0_i32 = arith.constant 0 : i32
    %c0_i32_0 = arith.constant 0 : i32
    %c0_i32_1 = arith.constant 0 : i32
    return %c0_i32, %c0_i32_0 : i32, i32
  }
  func.func @transform_3(%arg0: i32) -> (i32, i32) {
    %c0_i32 = arith.constant 0 : i32
    %c0_i32_0 = arith.constant 0 : i32
    return %arg0, %c0_i32 : i32, i32
  }
  func.func @transform_4(%arg0: i32) -> (i32, i32) {
    %c0_i32 = arith.constant 0 : i32
    %c0_i32_0 = arith.constant 0 : i32
    return %arg0, %c0_i32 : i32, i32
  }
  func.func @transform_5(%arg0: i32) -> (i32, i32) {
    %c0_i32 = arith.constant 0 : i32
    %c0_i32_0 = arith.constant 0 : i32
    return %arg0, %c0_i32 : i32, i32
  }
}

</mosaic_0001>

<llo_original>
// kernel: tpu_custom_call.1
$region0: #{tpu_custom_call.1}
  #allocation0 [shape = 'u32[]', space=smem, size = 0x4, offset = 0x4, fixed_abs, tag = 'smem constant byte address 0x4 - core index']
  #allocation1 [shape = 'u32[144,128]{1,0:T(1,128)}', space=vmem, size = 0x12000, scoped, tag = 'internal scratch']
  %s0 = inlined_call_operand.hbm [shape: bf16[256,128], index: 0, kind: input, shape index: {}]
  %s1 = inlined_call_operand.hbm [shape: bf16[128,384], index: 1, kind: input, shape index: {}]
  %s2 = inlined_call_operand.vmem [shape: f32[1,384], index: 2, kind: input, shape index: {}]
  %s3 = inlined_call_operand.hbm [shape: bf16[256,128], index: 3, kind: output, shape index: {0}]
  %s4 = inlined_call_operand.hbm [shape: bf16[256,128], index: 4, kind: output, shape index: {1}]
  %s5 = inlined_call_operand.hbm [shape: bf16[256,128], index: 5, kind: output, shape index: {2}]
  %6 = xla_tuple %s3, %s4, %s5
  %s7 = sld [smem:[#allocation0]]
  $region46: #{tpu_custom_call.1} parent=0
    _
  %s9 = ssub.s32 1, %s7
  %s10 = scalar_select 0, %s9, %s7
  $region1: #{tpu_custom_call.1} parent=0
    #allocation2 [shape = 'u8[65536]{0}', space=vmem, size = 0x10000, scoped, tag = 'input window, operand 0, single buffered']
    #allocation3 [shape = 's32[1]{0}', space=sflag, size = 0x4, scoped, tag = 'scoped memory for tpu_custom_call.1']
    #allocation4 [shape = 's32[1]{0}', space=sflag, size = 0x4, scoped, tag = 'scoped memory for tpu_custom_call.1']
    #allocation5 [shape = 'u8[98304]{0}', space=vmem, size = 0x18000, scoped, tag = 'input window, operand 1, single buffered']
    #allocation6 [shape = 's32[1]{0}', space=sflag, size = 0x4, scoped, tag = 'scoped memory for tpu_custom_call.1']
    #allocation7 [shape = 'u8[65536]{0}', space=vmem, size = 0x10000, scoped, tag = 'output window, operand 0, single buffered']
    #allocation8 [shape = 'u8[65536]{0}', space=vmem, size = 0x10000, scoped, tag = 'output window, operand 1, single buffered']
    #allocation9 [shape = 's32[1]{0}', space=sflag, size = 0x4, scoped, tag = 'scoped memory for tpu_custom_call.1']
    #allocation10 [shape = 'u8[65536]{0}', space=vmem, size = 0x10000, scoped, tag = 'output window, operand 2, single buffered']
    %11 = vsyncpa [#allocation3], 0
    %12 = vsyncpa [#allocation6], 0
    %13 = vsyncpa [#allocation4], 0
    %14 = vsyncpa [#allocation9], 0
    // Predicated region
    $region2: #{tpu_custom_call.1} parent=1 // pred_check
      _
    $region3: #{tpu_custom_call.1} parent=1 // pred_check_branch
      %16 = sbr.rel (0) target = $region5
    $region4: #{tpu_custom_call.1} parent=1 // pred_region
      %s18 = ssub.s32 2048, 2048
      %19 = vsyncadd [#allocation3], %s18
      %s20 = sshll.u32 [#allocation2], 4
      %s21 = int_to_ptr.vmem [resolvable:$true] %s20
      %26 = dma.hbm_to_vmem [thread:$0]  %s0, 2048, %s21, [#allocation3], 64, 64, 4
    $region5: #{tpu_custom_call.1} parent=1 // pred_fallthru
      _
    // Predicated region
    $region6: #{tpu_custom_call.1} parent=1 // pred_check
      _
    $region7: #{tpu_custom_call.1} parent=1 // pred_check_branch
      %28 = sbr.rel (0) target = $region9
    $region8: #{tpu_custom_call.1} parent=1 // pred_region
      %s30 = ssub.s32 3072, 3072
      %31 = vsyncadd [#allocation6], %s30
      %s32 = sshll.u32 [#allocation5], 4
      %s33 = int_to_ptr.vmem [resolvable:$true] %s32
      %38 = dma.hbm_to_vmem [thread:$0]  %s1, 3072, %s33, [#allocation6], 192, 192, 12
    $region9: #{tpu_custom_call.1} parent=1 // pred_fallthru
      _
    // Predicated region
    $region10: #{tpu_custom_call.1} parent=1 // pred_check
      _
    $region11: #{tpu_custom_call.1} parent=1 // pred_check_branch
      %40 = sbr.rel (0) target = $region13
    $region12: #{tpu_custom_call.1} parent=1 // pred_region
      _
    $region13: #{tpu_custom_call.1} parent=1 // pred_fallthru
      _
    // Predicated region
    $region14: #{tpu_custom_call.1} parent=1 // pred_check
      _
    $region15: #{tpu_custom_call.1} parent=1 // pred_check_branch
      %42 = sbr.rel (0) target = $region17
    $region16: #{tpu_custom_call.1} parent=1 // pred_region
      %43 = dma.done [#allocation3], 2048
    $region17: #{tpu_custom_call.1} parent=1 // pred_fallthru
      _
    // Predicated region
    $region18: #{tpu_custom_call.1} parent=1 // pred_check
      _
    $region19: #{tpu_custom_call.1} parent=1 // pred_check_branch
      %45 = sbr.rel (0) target = $region21
    $region20: #{tpu_custom_call.1} parent=1 // pred_region
      %46 = dma.done [#allocation6], 3072
    $region21: #{tpu_custom_call.1} parent=1 // pred_fallthru
      _
    %v48 = vld [vmem:[#allocation2] sm:$0xf]
    %v49 = vld [vmem:[#allocation2 + $0x4] sm:$0xf]
    %v50 = vld [vmem:[#allocation2 + $0x8] sm:$0xf]
    %v51 = vld [vmem:[#allocation2 + $0xc] sm:$0xf]
    %v52 = vld [vmem:[#allocation2 + $0x10] sm:$0xf]
    %v53 = vld [vmem:[#allocation2 + $0x14] sm:$0xf]
    %v54 = vld [vmem:[#allocation2 + $0x18] sm:$0xf]
    %v55 = vld [vmem:[#allocation2 + $0x1c] sm:$0xf]
    %v56 = vld [vmem:[#allocation2 + $0x20] sm:$0xf]
    %v57 = vld [vmem:[#allocation2 + $0x24] sm:$0xf]
    %v58 = vld [vmem:[#allocation2 + $0x28] sm:$0xf]
    %v59 = vld [vmem:[#allocation2 + $0x2c] sm:$0xf]
    %v60 = vld [vmem:[#allocation2 + $0x30] sm:$0xf]
    %v61 = vld [vmem:[#allocation2 + $0x34] sm:$0xf]
    %v62 = vld [vmem:[#allocation2 + $0x38] sm:$0xf]
    %v63 = vld [vmem:[#allocation2 + $0x3c] sm:$0xf]
    %v64 = vld [vmem:[#allocation2 + $0x40] sm:$0xf]
    %v65 = vld [vmem:[#allocation2 + $0x44] sm:$0xf]
    %v66 = vld [vmem:[#allocation2 + $0x48] sm:$0xf]
    %v67 = vld [vmem:[#allocation2 + $0x4c] sm:$0xf]
    %v68 = vld [vmem:[#allocation2 + $0x50] sm:$0xf]
    %v69 = vld [vmem:[#allocation2 + $0x54] sm:$0xf]
    %v70 = vld [vmem:[#allocation2 + $0x58] sm:$0xf]
    %v71 = vld [vmem:[#allocation2 + $0x5c] sm:$0xf]
    %v72 = vld [vmem:[#allocation2 + $0x60] sm:$0xf]
    %v73 = vld [vmem:[#allocation2 + $0x64] sm:$0xf]
    %v74 = vld [vmem:[#allocation2 + $0x68] sm:$0xf]
    %v75 = vld [vmem:[#allocation2 + $0x6c] sm:$0xf]
    %v76 = vld [vmem:[#allocation2 + $0x70] sm:$0xf]
    %v77 = vld [vmem:[#allocation2 + $0x74] sm:$0xf]
    %v78 = vld [vmem:[#allocation2 + $0x78] sm:$0xf]
    %v79 = vld [vmem:[#allocation2 + $0x7c] sm:$0xf]
    %v80 = vld [vmem:[#allocation5] sm:$0xff]
    %v81 = vld [vmem:[#allocation5 + $0x8] sm:$0xf]
    %v82 = vld [vmem:[#allocation5 + $0xc] sm:$0xff]
    %v83 = vld [vmem:[#allocation5 + $0x14] sm:$0xf]
    %v84 = vld [vmem:[#allocation5 + $0x18] sm:$0xff]
    %v85 = vld [vmem:[#allocation5 + $0x20] sm:$0xf]
    %v86 = vld [vmem:[#allocation5 + $0x24] sm:$0xff]
    %v87 = vld [vmem:[#allocation5 + $0x2c] sm:$0xf]
    %v88 = vld [vmem:[#allocation5 + $0x30] sm:$0xff]
    %v89 = vld [vmem:[#allocation5 + $0x38] sm:$0xf]
    %v90 = vld [vmem:[#allocation5 + $0x3c] sm:$0xff]
    %v91 = vld [vmem:[#allocation5 + $0x44] sm:$0xf]
    %v92 = vld [vmem:[#allocation5 + $0x48] sm:$0xff]
    %v93 = vld [vmem:[#allocation5 + $0x50] sm:$0xf]
    %v94 = vld [vmem:[#allocation5 + $0x54] sm:$0xff]
    %v95 = vld [vmem:[#allocation5 + $0x5c] sm:$0xf]
    %v96 = vld [vmem:[#allocation5 + $0x60] sm:$0xff]
    %v97 = vld [vmem:[#allocation5 + $0x68] sm:$0xf]
    %v98 = vld [vmem:[#allocation5 + $0x6c] sm:$0xff]
    %v99 = vld [vmem:[#allocation5 + $0x74] sm:$0xf]
    %v100 = vld [vmem:[#allocation5 + $0x78] sm:$0xff]
    %v101 = vld [vmem:[#allocation5 + $0x80] sm:$0xf]
    %v102 = vld [vmem:[#allocation5 + $0x84] sm:$0xff]
    %v103 = vld [vmem:[#allocation5 + $0x8c] sm:$0xf]
    %v104 = vld [vmem:[#allocation5 + $0x90] sm:$0xff]
    %v105 = vld [vmem:[#allocation5 + $0x98] sm:$0xf]
    %v106 = vld [vmem:[#allocation5 + $0x9c] sm:$0xff]
    %v107 = vld [vmem:[#allocation5 + $0xa4] sm:$0xf]
    %v108 = vld [vmem:[#allocation5 + $0xa8] sm:$0xff]
    %v109 = vld [vmem:[#allocation5 + $0xb0] sm:$0xf]
    %v110 = vld [vmem:[#allocation5 + $0xb4] sm:$0xff]
    %v111 = vld [vmem:[#allocation5 + $0xbc] sm:$0xf]
    %v112 = vld [vmem:[%s2] sm:$0x7]
    %v114 = vlaneseq
    %v115 = vshrl.u32 %v114, 7
    %v116 = vsub.s32 0, %v115
    %v117 = vrot.slane %v112, %v116
    %v118 = vlaneseq
    %v119 = vshrl.u32 %v118, 7
    %v120 = vsub.s32 1, %v119
    %v121 = vrot.slane %v112, %v120
    %v122 = vlaneseq
    %v123 = vshrl.u32 %v122, 7
    %v124 = vsub.s32 2, %v123
    %v125 = vrot.slane %v112, %v124
    %v161 = vunpack.c.l.b16 %v48
    %v162 = vunpack.c.l.b16 %v49
    %v163 = vunpack.c.l.b16 %v50
    %v164 = vunpack.c.l.b16 %v51
    %v165 = vunpack.c.l.b16 %v52
    %v166 = vunpack.c.l.b16 %v53
    %v167 = vunpack.c.l.b16 %v54
    %v168 = vunpack.c.l.b16 %v55
    %v169 = vunpack.c.l.b16 %v56
    %v170 = vunpack.c.l.b16 %v57
    %v171 = vunpack.c.l.b16 %v58
    %v172 = vunpack.c.l.b16 %v59
    %v173 = vunpack.c.l.b16 %v60
    %v174 = vunpack.c.l.b16 %v61
    %v175 = vunpack.c.l.b16 %v62
    %v176 = vunpack.c.l.b16 %v63
    %v177 = vunpack.c.l.b16 %v64
    %v178 = vunpack.c.l.b16 %v65
    %v179 = vunpack.c.l.b16 %v66
    %v180 = vunpack.c.l.b16 %v67
    %v181 = vunpack.c.l.b16 %v68
    %v182 = vunpack.c.l.b16 %v69
    %v183 = vunpack.c.l.b16 %v70
    %v184 = vunpack.c.l.b16 %v71
    %v185 = vunpack.c.l.b16 %v72
    %v186 = vunpack.c.l.b16 %v73
    %v187 = vunpack.c.l.b16 %v74
    %v188 = vunpack.c.l.b16 %v75
    %v189 = vunpack.c.l.b16 %v76
    %v190 = vunpack.c.l.b16 %v77
    %v191 = vunpack.c.l.b16 %v78
    %v192 = vunpack.c.l.b16 %v79
    %v193 = vpack.c.b16 %v162, %v161
    %v194 = vpack.c.b16 %v164, %v163
    %v195 = vpack.c.b16 %v166, %v165
    %v196 = vpack.c.b16 %v168, %v167
    %v197 = vpack.c.b16 %v170, %v169
    %v198 = vpack.c.b16 %v172, %v171
    %v199 = vpack.c.b16 %v174, %v173
    %v200 = vpack.c.b16 %v176, %v175
    %v201 = vpack.c.b16 %v178, %v177
    %v202 = vpack.c.b16 %v180, %v179
    %v203 = vpack.c.b16 %v182, %v181
    %v204 = vpack.c.b16 %v184, %v183
    %v205 = vpack.c.b16 %v186, %v185
    %v206 = vpack.c.b16 %v188, %v187
    %v207 = vpack.c.b16 %v190, %v189
    %v208 = vpack.c.b16 %v192, %v191
    %v257 = vunpack.c.l.b16 %v80
    %v258 = vunpack.c.h.b16 %v80
    %v259 = vunpack.c.l.b16 %v81
    %v260 = vunpack.c.l.b16 %v82
    %v261 = vunpack.c.h.b16 %v82
    %v262 = vunpack.c.l.b16 %v83
    %v263 = vunpack.c.l.b16 %v84
    %v264 = vunpack.c.h.b16 %v84
    %v265 = vunpack.c.l.b16 %v85
    %v266 = vunpack.c.l.b16 %v86
    %v267 = vunpack.c.h.b16 %v86
    %v268 = vunpack.c.l.b16 %v87
    %v269 = vunpack.c.l.b16 %v88
    %v270 = vunpack.c.h.b16 %v88
    %v271 = vunpack.c.l.b16 %v89
    %v272 = vunpack.c.l.b16 %v90
    %v273 = vunpack.c.h.b16 %v90
    %v274 = vunpack.c.l.b16 %v91
    %v275 = vunpack.c.l.b16 %v92
    %v276 = vunpack.c.h.b16 %v92
    %v277 = vunpack.c.l.b16 %v93
    %v278 = vunpack.c.l.b16 %v94
    %v279 = vunpack.c.h.b16 %v94
    %v280 = vunpack.c.l.b16 %v95
    %v281 = vunpack.c.l.b16 %v96
    %v282 = vunpack.c.h.b16 %v96
    %v283 = vunpack.c.l.b16 %v97
    %v284 = vunpack.c.l.b16 %v98
    %v285 = vunpack.c.h.b16 %v98
    %v286 = vunpack.c.l.b16 %v99
    %v287 = vunpack.c.l.b16 %v100
    %v288 = vunpack.c.h.b16 %v100
    %v289 = vunpack.c.l.b16 %v101
    %v290 = vunpack.c.l.b16 %v102
    %v291 = vunpack.c.h.b16 %v102
    %v292 = vunpack.c.l.b16 %v103
    %v293 = vunpack.c.l.b16 %v104
    %v294 = vunpack.c.h.b16 %v104
    %v295 = vunpack.c.l.b16 %v105
    %v296 = vunpack.c.l.b16 %v106
    %v297 = vunpack.c.h.b16 %v106
    %v298 = vunpack.c.l.b16 %v107
    %v299 = vunpack.c.l.b16 %v108
    %v300 = vunpack.c.h.b16 %v108
    %v301 = vunpack.c.l.b16 %v109
    %v302 = vunpack.c.l.b16 %v110
    %v303 = vunpack.c.h.b16 %v110
    %v304 = vunpack.c.l.b16 %v111
    %v305 = vpack.c.b16 %v260, %v257
    %v306 = vpack.c.b16 %v261, %v258
    %v307 = vpack.c.b16 %v262, %v259
    %v308 = vpack.c.b16 %v266, %v263
    %v309 = vpack.c.b16 %v267, %v264
    %v310 = vpack.c.b16 %v268, %v265
    %v311 = vpack.c.b16 %v272, %v269
    %v312 = vpack.c.b16 %v273, %v270
    %v313 = vpack.c.b16 %v274, %v271
    %v314 = vpack.c.b16 %v278, %v275
    %v315 = vpack.c.b16 %v279, %v276
    %v316 = vpack.c.b16 %v280, %v277
    %v317 = vpack.c.b16 %v284, %v281
    %v318 = vpack.c.b16 %v285, %v282
    %v319 = vpack.c.b16 %v286, %v283
    %v320 = vpack.c.b16 %v290, %v287
    %v321 = vpack.c.b16 %v291, %v288
    %v322 = vpack.c.b16 %v292, %v289
    %v323 = vpack.c.b16 %v296, %v293
    %v324 = vpack.c.b16 %v297, %v294
    %v325 = vpack.c.b16 %v298, %v295
    %v326 = vpack.c.b16 %v302, %v299
    %v327 = vpack.c.b16 %v303, %v300
    %v328 = vpack.c.b16 %v304, %v301
    %353 = vmatprep.subr.bf16.mxu0 %v306
    %354 = vmatpush1.bf16.msra.mxu0 %v305
    %355 = vmatprep.subr.bf16.mxu0 %v309
    %356 = vmatpush1.bf16.msra.mxu0 %v308
    %357 = vmatprep.subr.bf16.mxu0 %v312
    %358 = vmatpush1.bf16.msra.mxu0 %v311
    %359 = vmatprep.subr.bf16.mxu0 %v315
    %360 = vmatpush1.bf16.msra.mxu0 %v314
    %361 = vmatprep.subr.bf16.mxu0 %v318
    %362 = vmatpush1.bf16.msra.mxu0 %v317
    %363 = vmatprep.subr.bf16.mxu0 %v321
    %364 = vmatpush1.bf16.msra.mxu0 %v320
    %365 = vmatprep.subr.bf16.mxu0 %v324
    %366 = vmatpush1.bf16.msra.mxu0 %v323
    %367 = vmatprep.subr.bf16.mxu0 %v327
    %368 = vmatpush1.bf16.msra.mxu0 %v326
    %369 = vmatprep.subr.bf16.mxu0 0
    %370 = vmatpush1.bf16.msra.mxu0 0
    %371 = vmatprep.subr.bf16.mxu0 0
    %372 = vmatpush1.bf16.msra.mxu0 0
    %373 = vmatprep.subr.bf16.mxu0 0
    %374 = vmatpush1.bf16.msra.mxu0 0
    %375 = vmatprep.subr.bf16.mxu0 0
    %376 = vmatpush1.bf16.msra.mxu0 0
    %377 = vmatprep.subr.bf16.mxu0 0
    %378 = vmatpush1.bf16.msra.mxu0 0
    %379 = vmatprep.subr.bf16.mxu0 0
    %380 = vmatpush1.bf16.msra.mxu0 0
    %381 = vmatprep.subr.bf16.mxu0 0
    %382 = vmatpush1.bf16.msra.mxu0 0
    %383 = vmatprep.subr.bf16.mxu0 0
    %384 = vmatpush1.bf16.msra.mxu0 0
    %385 = vmatprep.mubr.bf16.mxu0 0
    %386 = vmatmul.mubr.bf16.gmra.mrb[0].mxu0 %v193
    %v387 = vpop.f32.mrb[0].mxu0
    %v388 = vadd.f32 %v117, %v387
    %v389 = vpop.f32.mrb[0].mxu0
    %v390 = vadd.f32 %v121, %v389
    %v391 = vpop.f32.mrb[0].mxu0
    %v392 = vadd.f32 %v117, %v391
    %v393 = vpop.f32.mrb[0].mxu0
    %v394 = vadd.f32 %v121, %v393
    %395 = vmatprep.mubr.bf16.mxu0 0
    %396 = vmatmul.mubr.bf16.gmra.mrb[0].mxu0 %v194
    %v397 = vpop.f32.mrb[0].mxu0
    %v398 = vadd.f32 %v117, %v397
    %v399 = vpop.f32.mrb[0].mxu0
    %v400 = vadd.f32 %v121, %v399
    %v401 = vpop.f32.mrb[0].mxu0
    %v402 = vadd.f32 %v117, %v401
    %v403 = vpop.f32.mrb[0].mxu0
    %v404 = vadd.f32 %v121, %v403
    %405 = vmatprep.mubr.bf16.mxu0 0
    %406 = vmatmul.mubr.bf16.gmra.mrb[0].mxu0 %v195
    %v407 = vpop.f32.mrb[0].mxu0
    %v408 = vadd.f32 %v117, %v407
    %v409 = vpop.f32.mrb[0].mxu0
    %v410 = vadd.f32 %v121, %v409
    %v411 = vpop.f32.mrb[0].mxu0
    %v412 = vadd.f32 %v117, %v411
    %v413 = vpop.f32.mrb[0].mxu0
    %v414 = vadd.f32 %v121, %v413
    %415 = vmatprep.mubr.bf16.mxu0 0
    %416 = vmatmul.mubr.bf16.gmra.mrb[0].mxu0 %v196
    %v417 = vpop.f32.mrb[0].mxu0
    %v418 = vadd.f32 %v117, %v417
    %v419 = vpop.f32.mrb[0].mxu0
    %v420 = vadd.f32 %v121, %v419
    %v421 = vpop.f32.mrb[0].mxu0
    %v422 = vadd.f32 %v117, %v421
    %v423 = vpop.f32.mrb[0].mxu0
    %v424 = vadd.f32 %v121, %v423
    %425 = vmatprep.mubr.bf16.mxu0 0
    %426 = vmatmul.mubr.bf16.gmra.mrb[0].mxu0 %v197
    %v427 = vpop.f32.mrb[0].mxu0
    %v428 = vadd.f32 %v117, %v427
    %v429 = vpop.f32.mrb[0].mxu0
    %v430 = vadd.f32 %v121, %v429
    %v431 = vpop.f32.mrb[0].mxu0
    %v432 = vadd.f32 %v117, %v431
    %v433 = vpop.f32.mrb[0].mxu0
    %v434 = vadd.f32 %v121, %v433
    %435 = vmatprep.mubr.bf16.mxu0 0
    %436 = vmatmul.mubr.bf16.gmra.mrb[0].mxu0 %v198
    %v437 = vpop.f32.mrb[0].mxu0
    %v438 = vadd.f32 %v117, %v437
    %v439 = vpop.f32.mrb[0].mxu0
    %v440 = vadd.f32 %v121, %v439
    %v441 = vpop.f32.mrb[0].mxu0
    %v442 = vadd.f32 %v117, %v441
    %v443 = vpop.f32.mrb[0].mxu0
    %v444 = vadd.f32 %v121, %v443
    %445 = vmatprep.mubr.bf16.mxu0 0
    %446 = vmatmul.mubr.bf16.gmra.mrb[0].mxu0 %v199
    %v447 = vpop.f32.mrb[0].mxu0
    %v448 = vadd.f32 %v117, %v447
    %v449 = vpop.f32.mrb[0].mxu0
    %v450 = vadd.f32 %v121, %v449
    %v451 = vpop.f32.mrb[0].mxu0
    %v452 = vadd.f32 %v117, %v451
    %v453 = vpop.f32.mrb[0].mxu0
    %v454 = vadd.f32 %v121, %v453
    %455 = vmatprep.mubr.bf16.mxu0 0
    %456 = vmatmul.mubr.bf16.gmra.mrb[0].mxu0 %v200
    %v457 = vpop.f32.mrb[0].mxu0
    %v458 = vadd.f32 %v117, %v457
    %v459 = vpop.f32.mrb[0].mxu0
    %v460 = vadd.f32 %v121, %v459
    %v461 = vpop.f32.mrb[0].mxu0
    %v462 = vadd.f32 %v117, %v461
    %v463 = vpop.f32.mrb[0].mxu0
    %v464 = vadd.f32 %v121, %v463
    %465 = vmatprep.mubr.bf16.mxu0 0
    %466 = vmatmul.mubr.bf16.gmra.mrb[0].mxu0 %v201
    %v467 = vpop.f32.mrb[0].mxu0
    %v468 = vadd.f32 %v117, %v467
    %v469 = vpop.f32.mrb[0].mxu0
    %v470 = vadd.f32 %v121, %v469
    %v471 = vpop.f32.mrb[0].mxu0
    %v472 = vadd.f32 %v117, %v471
    %v473 = vpop.f32.mrb[0].mxu0
    %v474 = vadd.f32 %v121, %v473
    %475 = vmatprep.mubr.bf16.mxu0 0
    %476 = vmatmul.mubr.bf16.gmra.mrb[0].mxu0 %v202
    %v477 = vpop.f32.mrb[0].mxu0
    %v478 = vadd.f32 %v117, %v477
    %v479 = vpop.f32.mrb[0].mxu0
    %v480 = vadd.f32 %v121, %v479
    %v481 = vpop.f32.mrb[0].mxu0
    %v482 = vadd.f32 %v117, %v481
    %v483 = vpop.f32.mrb[0].mxu0
    %v484 = vadd.f32 %v121, %v483
    %485 = vmatprep.mubr.bf16.mxu0 0
    %486 = vmatmul.mubr.bf16.gmra.mrb[0].mxu0 %v203
    %v487 = vpop.f32.mrb[0].mxu0
    %v488 = vadd.f32 %v117, %v487
    %v489 = vpop.f32.mrb[0].mxu0
    %v490 = vadd.f32 %v121, %v489
    %v491 = vpop.f32.mrb[0].mxu0
    %v492 = vadd.f32 %v117, %v491
    %v493 = vpop.f32.mrb[0].mxu0
    %v494 = vadd.f32 %v121, %v493
    %495 = vmatprep.mubr.bf16.mxu0 0
    %496 = vmatmul.mubr.bf16.gmra.mrb[0].mxu0 %v204
    %v497 = vpop.f32.mrb[0].mxu0
    %v498 = vadd.f32 %v117, %v497
    %v499 = vpop.f32.mrb[0].mxu0
    %v500 = vadd.f32 %v121, %v499
    %v501 = vpop.f32.mrb[0].mxu0
    %v502 = vadd.f32 %v117, %v501
    %v503 = vpop.f32.mrb[0].mxu0
    %v504 = vadd.f32 %v121, %v503
    %505 = vmatprep.mubr.bf16.mxu0 0
    %506 = vmatmul.mubr.bf16.gmra.mrb[0].mxu0 %v205
    %v507 = vpop.f32.mrb[0].mxu0
    %v508 = vadd.f32 %v117, %v507
    %v509 = vpop.f32.mrb[0].mxu0
    %v510 = vadd.f32 %v121, %v509
    %v511 = vpop.f32.mrb[0].mxu0
    %v512 = vadd.f32 %v117, %v511
    %v513 = vpop.f32.mrb[0].mxu0
    %v514 = vadd.f32 %v121, %v513
    %515 = vmatprep.mubr.bf16.mxu0 0
    %516 = vmatmul.mubr.bf16.gmra.mrb[0].mxu0 %v206
    %v517 = vpop.f32.mrb[0].mxu0
    %v518 = vadd.f32 %v117, %v517
    %v519 = vpop.f32.mrb[0].mxu0
    %v520 = vadd.f32 %v121, %v519
    %v521 = vpop.f32.mrb[0].mxu0
    %v522 = vadd.f32 %v117, %v521
    %v523 = vpop.f32.mrb[0].mxu0
    %v524 = vadd.f32 %v121, %v523
    %525 = vmatprep.mubr.bf16.mxu0 0
    %526 = vmatmul.mubr.bf16.gmra.mrb[0].mxu0 %v207
    %v527 = vpop.f32.mrb[0].mxu0
    %v528 = vadd.f32 %v117, %v527
    %v529 = vpop.f32.mrb[0].mxu0
    %v530 = vadd.f32 %v121, %v529
    %v531 = vpop.f32.mrb[0].mxu0
    %v532 = vadd.f32 %v117, %v531
    %v533 = vpop.f32.mrb[0].mxu0
    %v534 = vadd.f32 %v121, %v533
    %535 = vmatprep.mubr.bf16.mxu0 0
    %536 = vmatmul.mubr.bf16.gmra.mrb[0].mxu0 %v208
    %v537 = vpop.f32.mrb[0].mxu0
    %v538 = vadd.f32 %v117, %v537
    %v539 = vpop.f32.mrb[0].mxu0
    %v540 = vadd.f32 %v121, %v539
    %v541 = vpop.f32.mrb[0].mxu0
    %v542 = vadd.f32 %v117, %v541
    %v543 = vpop.f32.mrb[0].mxu0
    %v544 = vadd.f32 %v121, %v543
    %545 = vdwg.mxu0
    %546 = vmatprep.subr.bf16.mxu0 0
    %547 = vmatpush1.bf16.msra.mxu0 %v307
    %548 = vmatprep.subr.bf16.mxu0 0
    %549 = vmatpush1.bf16.msra.mxu0 %v310
    %550 = vmatprep.subr.bf16.mxu0 0
    %551 = vmatpush1.bf16.msra.mxu0 %v313
    %552 = vmatprep.subr.bf16.mxu0 0
    %553 = vmatpush1.bf16.msra.mxu0 %v316
    %554 = vmatprep.subr.bf16.mxu0 0
    %555 = vmatpush1.bf16.msra.mxu0 %v319
    %556 = vmatprep.subr.bf16.mxu0 0
    %557 = vmatpush1.bf16.msra.mxu0 %v322
    %558 = vmatprep.subr.bf16.mxu0 0
    %559 = vmatpush1.bf16.msra.mxu0 %v325
    %560 = vmatprep.subr.bf16.mxu0 0
    %561 = vmatpush1.bf16.msra.mxu0 %v328
    %562 = vmatprep.subr.bf16.mxu0 0
    %563 = vmatpush1.bf16.msra.mxu0 0
    %564 = vmatprep.subr.bf16.mxu0 0
    %565 = vmatpush1.bf16.msra.mxu0 0
    %566 = vmatprep.subr.bf16.mxu0 0
    %567 = vmatpush1.bf16.msra.mxu0 0
    %568 = vmatprep.subr.bf16.mxu0 0
    %569 = vmatpush1.bf16.msra.mxu0 0
    %570 = vmatprep.subr.bf16.mxu0 0
    %571 = vmatpush1.bf16.msra.mxu0 0
    %572 = vmatprep.subr.bf16.mxu0 0
    %573 = vmatpush1.bf16.msra.mxu0 0
    %574 = vmatprep.subr.bf16.mxu0 0
    %575 = vmatpush1.bf16.msra.mxu0 0
    %576 = vmatprep.subr.bf16.mxu0 0
    %577 = vmatpush1.bf16.msra.mxu0 0
    %578 = vmatprep.mubr.bf16.mxu0 0
    %579 = vmatmul.mubr.bf16.gmra.mrb[0].mxu0 %v193
    %v580 = vpop.f32.mrb[0].mxu0
    %v581 = vadd.f32 %v125, %v580
    %v582 = vpop.f32.mrb[0].mxu0
    %v583 = vpop.f32.mrb[0].mxu0
    %v584 = vadd.f32 %v125, %v583
    %v585 = vpop.f32.mrb[0].mxu0
    %586 = vmatprep.mubr.bf16.mxu0 0
    %587 = vmatmul.mubr.bf16.gmra.mrb[0].mxu0 %v194
    %v588 = vpop.f32.mrb[0].mxu0
    %v589 = vadd.f32 %v125, %v588
    %v590 = vpop.f32.mrb[0].mxu0
    %v591 = vpop.f32.mrb[0].mxu0
    %v592 = vadd.f32 %v125, %v591
    %v593 = vpop.f32.mrb[0].mxu0
    %594 = vmatprep.mubr.bf16.mxu0 0
    %595 = vmatmul.mubr.bf16.gmra.mrb[0].mxu0 %v195
    %v596 = vpop.f32.mrb[0].mxu0
    %v597 = vadd.f32 %v125, %v596
    %v598 = vpop.f32.mrb[0].mxu0
    %v599 = vpop.f32.mrb[0].mxu0
    %v600 = vadd.f32 %v125, %v599
    %v601 = vpop.f32.mrb[0].mxu0
    %602 = vmatprep.mubr.bf16.mxu0 0
    %603 = vmatmul.mubr.bf16.gmra.mrb[0].mxu0 %v196
    %v604 = vpop.f32.mrb[0].mxu0
    %v605 = vadd.f32 %v125, %v604
    %v606 = vpop.f32.mrb[0].mxu0
    %v607 = vpop.f32.mrb[0].mxu0
    %v608 = vadd.f32 %v125, %v607
    %v609 = vpop.f32.mrb[0].mxu0
    %610 = vmatprep.mubr.bf16.mxu0 0
    %611 = vmatmul.mubr.bf16.gmra.mrb[0].mxu0 %v197
    %v612 = vpop.f32.mrb[0].mxu0
    %v613 = vadd.f32 %v125, %v612
    %v614 = vpop.f32.mrb[0].mxu0
    %v615 = vpop.f32.mrb[0].mxu0
    %v616 = vadd.f32 %v125, %v615
    %v617 = vpop.f32.mrb[0].mxu0
    %618 = vmatprep.mubr.bf16.mxu0 0
    %619 = vmatmul.mubr.bf16.gmra.mrb[0].mxu0 %v198
    %v620 = vpop.f32.mrb[0].mxu0
    %v621 = vadd.f32 %v125, %v620
    %v622 = vpop.f32.mrb[0].mxu0
    %v623 = vpop.f32.mrb[0].mxu0
    %v624 = vadd.f32 %v125, %v623
    %v625 = vpop.f32.mrb[0].mxu0
    %626 = vmatprep.mubr.bf16.mxu0 0
    %627 = vmatmul.mubr.bf16.gmra.mrb[0].mxu0 %v199
    %v628 = vpop.f32.mrb[0].mxu0
    %v629 = vadd.f32 %v125, %v628
    %v630 = vpop.f32.mrb[0].mxu0
    %v631 = vpop.f32.mrb[0].mxu0
    %v632 = vadd.f32 %v125, %v631
    %v633 = vpop.f32.mrb[0].mxu0
    %634 = vmatprep.mubr.bf16.mxu0 0
    %635 = vmatmul.mubr.bf16.gmra.mrb[0].mxu0 %v200
    %v636 = vpop.f32.mrb[0].mxu0
    %v637 = vadd.f32 %v125, %v636
    %v638 = vpop.f32.mrb[0].mxu0
    %v639 = vpop.f32.mrb[0].mxu0
    %v640 = vadd.f32 %v125, %v639
    %v641 = vpop.f32.mrb[0].mxu0
    %642 = vmatprep.mubr.bf16.mxu0 0
    %643 = vmatmul.mubr.bf16.gmra.mrb[0].mxu0 %v201
    %v644 = vpop.f32.mrb[0].mxu0
    %v645 = vadd.f32 %v125, %v644
    %v646 = vpop.f32.mrb[0].mxu0
    %v647 = vpop.f32.mrb[0].mxu0
    %v648 = vadd.f32 %v125, %v647
    %v649 = vpop.f32.mrb[0].mxu0
    %650 = vmatprep.mubr.bf16.mxu0 0
    %651 = vmatmul.mubr.bf16.gmra.mrb[0].mxu0 %v202
    %v652 = vpop.f32.mrb[0].mxu0
    %v653 = vadd.f32 %v125, %v652
    %v654 = vpop.f32.mrb[0].mxu0
    %v655 = vpop.f32.mrb[0].mxu0
    %v656 = vadd.f32 %v125, %v655
    %v657 = vpop.f32.mrb[0].mxu0
    %658 = vmatprep.mubr.bf16.mxu0 0
    %659 = vmatmul.mubr.bf16.gmra.mrb[0].mxu0 %v203
    %v660 = vpop.f32.mrb[0].mxu0
    %v661 = vadd.f32 %v125, %v660
    %v662 = vpop.f32.mrb[0].mxu0
    %v663 = vpop.f32.mrb[0].mxu0
    %v664 = vadd.f32 %v125, %v663
    %v665 = vpop.f32.mrb[0].mxu0
    %666 = vmatprep.mubr.bf16.mxu0 0
    %667 = vmatmul.mubr.bf16.gmra.mrb[0].mxu0 %v204
    %v668 = vpop.f32.mrb[0].mxu0
    %v669 = vadd.f32 %v125, %v668
    %v670 = vpop.f32.mrb[0].mxu0
    %v671 = vpop.f32.mrb[0].mxu0
    %v672 = vadd.f32 %v125, %v671
    %v673 = vpop.f32.mrb[0].mxu0
    %674 = vmatprep.mubr.bf16.mxu0 0
    %675 = vmatmul.mubr.bf16.gmra.mrb[0].mxu0 %v205
    %v676 = vpop.f32.mrb[0].mxu0
    %v677 = vadd.f32 %v125, %v676
    %v678 = vpop.f32.mrb[0].mxu0
    %v679 = vpop.f32.mrb[0].mxu0
    %v680 = vadd.f32 %v125, %v679
    %v681 = vpop.f32.mrb[0].mxu0
    %682 = vmatprep.mubr.bf16.mxu0 0
    %683 = vmatmul.mubr.bf16.gmra.mrb[0].mxu0 %v206
    %v684 = vpop.f32.mrb[0].mxu0
    %v685 = vadd.f32 %v125, %v684
    %v686 = vpop.f32.mrb[0].mxu0
    %v687 = vpop.f32.mrb[0].mxu0
    %v688 = vadd.f32 %v125, %v687
    %v689 = vpop.f32.mrb[0].mxu0
    %690 = vmatprep.mubr.bf16.mxu0 0
    %691 = vmatmul.mubr.bf16.gmra.mrb[0].mxu0 %v207
    %v692 = vpop.f32.mrb[0].mxu0
    %v693 = vadd.f32 %v125, %v692
    %v694 = vpop.f32.mrb[0].mxu0
    %v695 = vpop.f32.mrb[0].mxu0
    %v696 = vadd.f32 %v125, %v695
    %v697 = vpop.f32.mrb[0].mxu0
    %698 = vmatprep.mubr.bf16.mxu0 0
    %699 = vmatmul.mubr.bf16.gmra.mrb[0].mxu0 %v208
    %v700 = vpop.f32.mrb[0].mxu0
    %v701 = vadd.f32 %v125, %v700
    %v702 = vpop.f32.mrb[0].mxu0
    %v703 = vpop.f32.mrb[0].mxu0
    %v704 = vadd.f32 %v125, %v703
    %v705 = vpop.f32.mrb[0].mxu0
    %706 = vdwg.mxu0
    %v707 = vmul.f32 %v388, 0.088388346
    %v708 = vmul.f32 %v392, 0.088388346
    %v709 = vmul.f32 %v398, 0.088388346
    %v710 = vmul.f32 %v402, 0.088388346
    %v711 = vmul.f32 %v408, 0.088388346
    %v712 = vmul.f32 %v412, 0.088388346
    %v713 = vmul.f32 %v418, 0.088388346
    %v714 = vmul.f32 %v422, 0.088388346
    %v715 = vmul.f32 %v428, 0.088388346
    %v716 = vmul.f32 %v432, 0.088388346
    %v717 = vmul.f32 %v438, 0.088388346
    %v718 = vmul.f32 %v442, 0.088388346
    %v719 = vmul.f32 %v448, 0.088388346
    %v720 = vmul.f32 %v452, 0.088388346
    %v721 = vmul.f32 %v458, 0.088388346
    %v722 = vmul.f32 %v462, 0.088388346
    %v723 = vmul.f32 %v468, 0.088388346
    %v724 = vmul.f32 %v472, 0.088388346
    %v725 = vmul.f32 %v478, 0.088388346
    %v726 = vmul.f32 %v482, 0.088388346
    %v727 = vmul.f32 %v488, 0.088388346
    %v728 = vmul.f32 %v492, 0.088388346
    %v729 = vmul.f32 %v498, 0.088388346
    %v730 = vmul.f32 %v502, 0.088388346
    %v731 = vmul.f32 %v508, 0.088388346
    %v732 = vmul.f32 %v512, 0.088388346
    %v733 = vmul.f32 %v518, 0.088388346
    %v734 = vmul.f32 %v522, 0.088388346
    %v735 = vmul.f32 %v528, 0.088388346
    %v736 = vmul.f32 %v532, 0.088388346
    %v737 = vmul.f32 %v538, 0.088388346
    %v738 = vmul.f32 %v542, 0.088388346
    %v739 = vpack.c.bf16 %v708, %v707
    %v740 = vpack.c.bf16 %v710, %v709
    %v741 = vpack.c.bf16 %v712, %v711
    %v742 = vpack.c.bf16 %v714, %v713
    %v743 = vpack.c.bf16 %v716, %v715
    %v744 = vpack.c.bf16 %v718, %v717
    %v745 = vpack.c.bf16 %v720, %v719
    %v746 = vpack.c.bf16 %v722, %v721
    %v747 = vpack.c.bf16 %v724, %v723
    %v748 = vpack.c.bf16 %v726, %v725
    %v749 = vpack.c.bf16 %v728, %v727
    %v750 = vpack.c.bf16 %v730, %v729
    %v751 = vpack.c.bf16 %v732, %v731
    %v752 = vpack.c.bf16 %v734, %v733
    %v753 = vpack.c.bf16 %v736, %v735
    %v754 = vpack.c.bf16 %v738, %v737
    %v771 = vunpack.c.l.b16 %v739
    %v772 = vunpack.c.h.b16 %v739
    %v773 = vunpack.c.l.b16 %v740
    %v774 = vunpack.c.h.b16 %v740
    %v775 = vunpack.c.l.b16 %v741
    %v776 = vunpack.c.h.b16 %v741
    %v777 = vunpack.c.l.b16 %v742
    %v778 = vunpack.c.h.b16 %v742
    %v779 = vunpack.c.l.b16 %v743
    %v780 = vunpack.c.h.b16 %v743
    %v781 = vunpack.c.l.b16 %v744
    %v782 = vunpack.c.h.b16 %v744
    %v783 = vunpack.c.l.b16 %v745
    %v784 = vunpack.c.h.b16 %v745
    %v785 = vunpack.c.l.b16 %v746
    %v786 = vunpack.c.h.b16 %v746
    %v787 = vunpack.c.l.b16 %v747
    %v788 = vunpack.c.h.b16 %v747
    %v789 = vunpack.c.l.b16 %v748
    %v790 = vunpack.c.h.b16 %v748
    %v791 = vunpack.c.l.b16 %v749
    %v792 = vunpack.c.h.b16 %v749
    %v793 = vunpack.c.l.b16 %v750
    %v794 = vunpack.c.h.b16 %v750
    %v795 = vunpack.c.l.b16 %v751
    %v796 = vunpack.c.h.b16 %v751
    %v797 = vunpack.c.l.b16 %v752
    %v798 = vunpack.c.h.b16 %v752
    %v799 = vunpack.c.l.b16 %v753
    %v800 = vunpack.c.h.b16 %v753
    %v801 = vunpack.c.l.b16 %v754
    %v802 = vunpack.c.h.b16 %v754
    %v803 = vpack.c.b16 %v771, %v771
    %v804 = vpack.c.b16 %v772, %v772
    %v805 = vpack.c.b16 %v773, %v773
    %v806 = vpack.c.b16 %v774, %v774
    %v807 = vpack.c.b16 %v775, %v775
    %v808 = vpack.c.b16 %v776, %v776
    %v809 = vpack.c.b16 %v777, %v777
    %v810 = vpack.c.b16 %v778, %v778
    %v811 = vpack.c.b16 %v779, %v779
    %v812 = vpack.c.b16 %v780, %v780
    %v813 = vpack.c.b16 %v781, %v781
    %v814 = vpack.c.b16 %v782, %v782
    %v815 = vpack.c.b16 %v783, %v783
    %v816 = vpack.c.b16 %v784, %v784
    %v817 = vpack.c.b16 %v785, %v785
    %v818 = vpack.c.b16 %v786, %v786
    %v819 = vpack.c.b16 %v787, %v787
    %v820 = vpack.c.b16 %v788, %v788
    %v821 = vpack.c.b16 %v789, %v789
    %v822 = vpack.c.b16 %v790, %v790
    %v823 = vpack.c.b16 %v791, %v791
    %v824 = vpack.c.b16 %v792, %v792
    %v825 = vpack.c.b16 %v793, %v793
    %v826 = vpack.c.b16 %v794, %v794
    %v827 = vpack.c.b16 %v795, %v795
    %v828 = vpack.c.b16 %v796, %v796
    %v829 = vpack.c.b16 %v797, %v797
    %v830 = vpack.c.b16 %v798, %v798
    %v831 = vpack.c.b16 %v799, %v799
    %v832 = vpack.c.b16 %v800, %v800
    %v833 = vpack.c.b16 %v801, %v801
    %v834 = vpack.c.b16 %v802, %v802
    %867 = vst [vmem:[#allocation7] sm:$0xf] %v803
    %868 = vst [vmem:[#allocation7 + $0x4] sm:$0xf] %v804
    %869 = vst [vmem:[#allocation7 + $0x8] sm:$0xf] %v805
    %870 = vst [vmem:[#allocation7 + $0xc] sm:$0xf] %v806
    %871 = vst [vmem:[#allocation7 + $0x10] sm:$0xf] %v807
    %872 = vst [vmem:[#allocation7 + $0x14] sm:$0xf] %v808
    %873 = vst [vmem:[#allocation7 + $0x18] sm:$0xf] %v809
    %874 = vst [vmem:[#allocation7 + $0x1c] sm:$0xf] %v810
    %875 = vst [vmem:[#allocation7 + $0x20] sm:$0xf] %v811
    %876 = vst [vmem:[#allocation7 + $0x24] sm:$0xf] %v812
    %877 = vst [vmem:[#allocation7 + $0x28] sm:$0xf] %v813
    %878 = vst [vmem:[#allocation7 + $0x2c] sm:$0xf] %v814
    %879 = vst [vmem:[#allocation7 + $0x30] sm:$0xf] %v815
    %880 = vst [vmem:[#allocation7 + $0x34] sm:$0xf] %v816
    %881 = vst [vmem:[#allocation7 + $0x38] sm:$0xf] %v817
    %882 = vst [vmem:[#allocation7 + $0x3c] sm:$0xf] %v818
    %883 = vst [vmem:[#allocation7 + $0x40] sm:$0xf] %v819
    %884 = vst [vmem:[#allocation7 + $0x44] sm:$0xf] %v820
    %885 = vst [vmem:[#allocation7 + $0x48] sm:$0xf] %v821
    %886 = vst [vmem:[#allocation7 + $0x4c] sm:$0xf] %v822
    %887 = vst [vmem:[#allocation7 + $0x50] sm:$0xf] %v823
    %888 = vst [vmem:[#allocation7 + $0x54] sm:$0xf] %v824
    %889 = vst [vmem:[#allocation7 + $0x58] sm:$0xf] %v825
    %890 = vst [vmem:[#allocation7 + $0x5c] sm:$0xf] %v826
    %891 = vst [vmem:[#allocation7 + $0x60] sm:$0xf] %v827
    %892 = vst [vmem:[#allocation7 + $0x64] sm:$0xf] %v828
    %893 = vst [vmem:[#allocation7 + $0x68] sm:$0xf] %v829
    %894 = vst [vmem:[#allocation7 + $0x6c] sm:$0xf] %v830
    %895 = vst [vmem:[#allocation7 + $0x70] sm:$0xf] %v831
    %896 = vst [vmem:[#allocation7 + $0x74] sm:$0xf] %v832
    %897 = vst [vmem:[#allocation7 + $0x78] sm:$0xf] %v833
    %898 = vst [vmem:[#allocation7 + $0x7c] sm:$0xf] %v834
    %v899 = vpack.c.bf16 %v394, %v390
    %v900 = vpack.c.bf16 %v404, %v400
    %v901 = vpack.c.bf16 %v414, %v410
    %v902 = vpack.c.bf16 %v424, %v420
    %v903 = vpack.c.bf16 %v434, %v430
    %v904 = vpack.c.bf16 %v444, %v440
    %v905 = vpack.c.bf16 %v454, %v450
    %v906 = vpack.c.bf16 %v464, %v460
    %v907 = vpack.c.bf16 %v474, %v470
    %v908 = vpack.c.bf16 %v484, %v480
    %v909 = vpack.c.bf16 %v494, %v490
    %v910 = vpack.c.bf16 %v504, %v500
    %v911 = vpack.c.bf16 %v514, %v510
    %v912 = vpack.c.bf16 %v524, %v520
    %v913 = vpack.c.bf16 %v534, %v530
    %v914 = vpack.c.bf16 %v544, %v540
    %v931 = vunpack.c.l.b16 %v899
    %v932 = vunpack.c.h.b16 %v899
    %v933 = vunpack.c.l.b16 %v900
    %v934 = vunpack.c.h.b16 %v900
    %v935 = vunpack.c.l.b16 %v901
    %v936 = vunpack.c.h.b16 %v901
    %v937 = vunpack.c.l.b16 %v902
    %v938 = vunpack.c.h.b16 %v902
    %v939 = vunpack.c.l.b16 %v903
    %v940 = vunpack.c.h.b16 %v903
    %v941 = vunpack.c.l.b16 %v904
    %v942 = vunpack.c.h.b16 %v904
    %v943 = vunpack.c.l.b16 %v905
    %v944 = vunpack.c.h.b16 %v905
    %v945 = vunpack.c.l.b16 %v906
    %v946 = vunpack.c.h.b16 %v906
    %v947 = vunpack.c.l.b16 %v907
    %v948 = vunpack.c.h.b16 %v907
    %v949 = vunpack.c.l.b16 %v908
    %v950 = vunpack.c.h.b16 %v908
    %v951 = vunpack.c.l.b16 %v909
    %v952 = vunpack.c.h.b16 %v909
    %v953 = vunpack.c.l.b16 %v910
    %v954 = vunpack.c.h.b16 %v910
    %v955 = vunpack.c.l.b16 %v911
    %v956 = vunpack.c.h.b16 %v911
    %v957 = vunpack.c.l.b16 %v912
    %v958 = vunpack.c.h.b16 %v912
    %v959 = vunpack.c.l.b16 %v913
    %v960 = vunpack.c.h.b16 %v913
    %v961 = vunpack.c.l.b16 %v914
    %v962 = vunpack.c.h.b16 %v914
    %v963 = vpack.c.b16 %v931, %v931
    %v964 = vpack.c.b16 %v932, %v932
    %v965 = vpack.c.b16 %v933, %v933
    %v966 = vpack.c.b16 %v934, %v934
    %v967 = vpack.c.b16 %v935, %v935
    %v968 = vpack.c.b16 %v936, %v936
    %v969 = vpack.c.b16 %v937, %v937
    %v970 = vpack.c.b16 %v938, %v938
    %v971 = vpack.c.b16 %v939, %v939
    %v972 = vpack.c.b16 %v940, %v940
    %v973 = vpack.c.b16 %v941, %v941
    %v974 = vpack.c.b16 %v942, %v942
    %v975 = vpack.c.b16 %v943, %v943
    %v976 = vpack.c.b16 %v944, %v944
    %v977 = vpack.c.b16 %v945, %v945
    %v978 = vpack.c.b16 %v946, %v946
    %v979 = vpack.c.b16 %v947, %v947
    %v980 = vpack.c.b16 %v948, %v948
    %v981 = vpack.c.b16 %v949, %v949
    %v982 = vpack.c.b16 %v950, %v950
    %v983 = vpack.c.b16 %v951, %v951
    %v984 = vpack.c.b16 %v952, %v952
    %v985 = vpack.c.b16 %v953, %v953
    %v986 = vpack.c.b16 %v954, %v954
    %v987 = vpack.c.b16 %v955, %v955
    %v988 = vpack.c.b16 %v956, %v956
    %v989 = vpack.c.b16 %v957, %v957
    %v990 = vpack.c.b16 %v958, %v958
    %v991 = vpack.c.b16 %v959, %v959
    %v992 = vpack.c.b16 %v960, %v960
    %v993 = vpack.c.b16 %v961, %v961
    %v994 = vpack.c.b16 %v962, %v962
    %1027 = vst [vmem:[#allocation8] sm:$0xf] %v963
    %1028 = vst [vmem:[#allocation8 + $0x4] sm:$0xf] %v964
    %1029 = vst [vmem:[#allocation8 + $0x8] sm:$0xf] %v965
    %1030 = vst [vmem:[#allocation8 + $0xc] sm:$0xf] %v966
    %1031 = vst [vmem:[#allocation8 + $0x10] sm:$0xf] %v967
    %1032 = vst [vmem:[#allocation8 + $0x14] sm:$0xf] %v968
    %1033 = vst [vmem:[#allocation8 + $0x18] sm:$0xf] %v969
    %1034 = vst [vmem:[#allocation8 + $0x1c] sm:$0xf] %v970
    %1035 = vst [vmem:[#allocation8 + $0x20] sm:$0xf] %v971
    %1036 = vst [vmem:[#allocation8 + $0x24] sm:$0xf] %v972
    %1037 = vst [vmem:[#allocation8 + $0x28] sm:$0xf] %v973
    %1038 = vst [vmem:[#allocation8 + $0x2c] sm:$0xf] %v974
    %1039 = vst [vmem:[#allocation8 + $0x30] sm:$0xf] %v975
    %1040 = vst [vmem:[#allocation8 + $0x34] sm:$0xf] %v976
    %1041 = vst [vmem:[#allocation8 + $0x38] sm:$0xf] %v977
    %1042 = vst [vmem:[#allocation8 + $0x3c] sm:$0xf] %v978
    %1043 = vst [vmem:[#allocation8 + $0x40] sm:$0xf] %v979
    %1044 = vst [vmem:[#allocation8 + $0x44] sm:$0xf] %v980
    %1045 = vst [vmem:[#allocation8 + $0x48] sm:$0xf] %v981
    %1046 = vst [vmem:[#allocation8 + $0x4c] sm:$0xf] %v982
    %1047 = vst [vmem:[#allocation8 + $0x50] sm:$0xf] %v983
    %1048 = vst [vmem:[#allocation8 + $0x54] sm:$0xf] %v984
    %1049 = vst [vmem:[#allocation8 + $0x58] sm:$0xf] %v985
    %1050 = vst [vmem:[#allocation8 + $0x5c] sm:$0xf] %v986
    %1051 = vst [vmem:[#allocation8 + $0x60] sm:$0xf] %v987
    %1052 = vst [vmem:[#allocation8 + $0x64] sm:$0xf] %v988
    %1053 = vst [vmem:[#allocation8 + $0x68] sm:$0xf] %v989
    %1054 = vst [vmem:[#allocation8 + $0x6c] sm:$0xf] %v990
    %1055 = vst [vmem:[#allocation8 + $0x70] sm:$0xf] %v991
    %1056 = vst [vmem:[#allocation8 + $0x74] sm:$0xf] %v992
    %1057 = vst [vmem:[#allocation8 + $0x78] sm:$0xf] %v993
    %1058 = vst [vmem:[#allocation8 + $0x7c] sm:$0xf] %v994
    %v1059 = vpack.c.bf16 %v584, %v581
    %v1060 = vpack.c.bf16 %v592, %v589
    %v1061 = vpack.c.bf16 %v600, %v597
    %v1062 = vpack.c.bf16 %v608, %v605
    %v1063 = vpack.c.bf16 %v616, %v613
    %v1064 = vpack.c.bf16 %v624, %v621
    %v1065 = vpack.c.bf16 %v632, %v629
    %v1066 = vpack.c.bf16 %v640, %v637
    %v1067 = vpack.c.bf16 %v648, %v645
    %v1068 = vpack.c.bf16 %v656, %v653
    %v1069 = vpack.c.bf16 %v664, %v661
    %v1070 = vpack.c.bf16 %v672, %v669
    %v1071 = vpack.c.bf16 %v680, %v677
    %v1072 = vpack.c.bf16 %v688, %v685
    %v1073 = vpack.c.bf16 %v696, %v693
    %v1074 = vpack.c.bf16 %v704, %v701
    %v1091 = vunpack.c.l.b16 %v1059
    %v1092 = vunpack.c.h.b16 %v1059
    %v1093 = vunpack.c.l.b16 %v1060
    %v1094 = vunpack.c.h.b16 %v1060
    %v1095 = vunpack.c.l.b16 %v1061
    %v1096 = vunpack.c.h.b16 %v1061
    %v1097 = vunpack.c.l.b16 %v1062
    %v1098 = vunpack.c.h.b16 %v1062
    %v1099 = vunpack.c.l.b16 %v1063
    %v1100 = vunpack.c.h.b16 %v1063
    %v1101 = vunpack.c.l.b16 %v1064
    %v1102 = vunpack.c.h.b16 %v1064
    %v1103 = vunpack.c.l.b16 %v1065
    %v1104 = vunpack.c.h.b16 %v1065
    %v1105 = vunpack.c.l.b16 %v1066
    %v1106 = vunpack.c.h.b16 %v1066
    %v1107 = vunpack.c.l.b16 %v1067
    %v1108 = vunpack.c.h.b16 %v1067
    %v1109 = vunpack.c.l.b16 %v1068
    %v1110 = vunpack.c.h.b16 %v1068
    %v1111 = vunpack.c.l.b16 %v1069
    %v1112 = vunpack.c.h.b16 %v1069
    %v1113 = vunpack.c.l.b16 %v1070
    %v1114 = vunpack.c.h.b16 %v1070
    %v1115 = vunpack.c.l.b16 %v1071
    %v1116 = vunpack.c.h.b16 %v1071
    %v1117 = vunpack.c.l.b16 %v1072
    %v1118 = vunpack.c.h.b16 %v1072
    %v1119 = vunpack.c.l.b16 %v1073
    %v1120 = vunpack.c.h.b16 %v1073
    %v1121 = vunpack.c.l.b16 %v1074
    %v1122 = vunpack.c.h.b16 %v1074
    %v1123 = vpack.c.b16 %v1091, %v1091
    %v1124 = vpack.c.b16 %v1092, %v1092
    %v1125 = vpack.c.b16 %v1093, %v1093
    %v1126 = vpack.c.b16 %v1094, %v1094
    %v1127 = vpack.c.b16 %v1095, %v1095
    %v1128 = vpack.c.b16 %v1096, %v1096
    %v1129 = vpack.c.b16 %v1097, %v1097
    %v1130 = vpack.c.b16 %v1098, %v1098
    %v1131 = vpack.c.b16 %v1099, %v1099
    %v1132 = vpack.c.b16 %v1100, %v1100
    %v1133 = vpack.c.b16 %v1101, %v1101
    %v1134 = vpack.c.b16 %v1102, %v1102
    %v1135 = vpack.c.b16 %v1103, %v1103
    %v1136 = vpack.c.b16 %v1104, %v1104
    %v1137 = vpack.c.b16 %v1105, %v1105
    %v1138 = vpack.c.b16 %v1106, %v1106
    %v1139 = vpack.c.b16 %v1107, %v1107
    %v1140 = vpack.c.b16 %v1108, %v1108
    %v1141 = vpack.c.b16 %v1109, %v1109
    %v1142 = vpack.c.b16 %v1110, %v1110
    %v1143 = vpack.c.b16 %v1111, %v1111
    %v1144 = vpack.c.b16 %v1112, %v1112
    %v1145 = vpack.c.b16 %v1113, %v1113
    %v1146 = vpack.c.b16 %v1114, %v1114
    %v1147 = vpack.c.b16 %v1115, %v1115
    %v1148 = vpack.c.b16 %v1116, %v1116
    %v1149 = vpack.c.b16 %v1117, %v1117
    %v1150 = vpack.c.b16 %v1118, %v1118
    %v1151 = vpack.c.b16 %v1119, %v1119
    %v1152 = vpack.c.b16 %v1120, %v1120
    %v1153 = vpack.c.b16 %v1121, %v1121
    %v1154 = vpack.c.b16 %v1122, %v1122
    %1187 = vst [vmem:[#allocation10] sm:$0xf] %v1123
    %1188 = vst [vmem:[#allocation10 + $0x4] sm:$0xf] %v1124
    %1189 = vst [vmem:[#allocation10 + $0x8] sm:$0xf] %v1125
    %1190 = vst [vmem:[#allocation10 + $0xc] sm:$0xf] %v1126
    %1191 = vst [vmem:[#allocation10 + $0x10] sm:$0xf] %v1127
    %1192 = vst [vmem:[#allocation10 + $0x14] sm:$0xf] %v1128
    %1193 = vst [vmem:[#allocation10 + $0x18] sm:$0xf] %v1129
    %1194 = vst [vmem:[#allocation10 + $0x1c] sm:$0xf] %v1130
    %1195 = vst [vmem:[#allocation10 + $0x20] sm:$0xf] %v1131
    %1196 = vst [vmem:[#allocation10 + $0x24] sm:$0xf] %v1132
    %1197 = vst [vmem:[#allocation10 + $0x28] sm:$0xf] %v1133
    %1198 = vst [vmem:[#allocation10 + $0x2c] sm:$0xf] %v1134
    %1199 = vst [vmem:[#allocation10 + $0x30] sm:$0xf] %v1135
    %1200 = vst [vmem:[#allocation10 + $0x34] sm:$0xf] %v1136
    %1201 = vst [vmem:[#allocation10 + $0x38] sm:$0xf] %v1137
    %1202 = vst [vmem:[#allocation10 + $0x3c] sm:$0xf] %v1138
    %1203 = vst [vmem:[#allocation10 + $0x40] sm:$0xf] %v1139
    %1204 = vst [vmem:[#allocation10 + $0x44] sm:$0xf] %v1140
    %1205 = vst [vmem:[#allocation10 + $0x48] sm:$0xf] %v1141
    %1206 = vst [vmem:[#allocation10 + $0x4c] sm:$0xf] %v1142
    %1207 = vst [vmem:[#allocation10 + $0x50] sm:$0xf] %v1143
    %1208 = vst [vmem:[#allocation10 + $0x54] sm:$0xf] %v1144
    %1209 = vst [vmem:[#allocation10 + $0x58] sm:$0xf] %v1145
    %1210 = vst [vmem:[#allocation10 + $0x5c] sm:$0xf] %v1146
    %1211 = vst [vmem:[#allocation10 + $0x60] sm:$0xf] %v1147
    %1212 = vst [vmem:[#allocation10 + $0x64] sm:$0xf] %v1148
    %1213 = vst [vmem:[#allocation10 + $0x68] sm:$0xf] %v1149
    %1214 = vst [vmem:[#allocation10 + $0x6c] sm:$0xf] %v1150
    %1215 = vst [vmem:[#allocation10 + $0x70] sm:$0xf] %v1151
    %1216 = vst [vmem:[#allocation10 + $0x74] sm:$0xf] %v1152
    %1217 = vst [vmem:[#allocation10 + $0x78] sm:$0xf] %v1153
    %1218 = vst [vmem:[#allocation10 + $0x7c] sm:$0xf] %v1154
    // Predicated region
    $region22: #{tpu_custom_call.1} parent=1 // pred_check
      _
    $region23: #{tpu_custom_call.1} parent=1 // pred_check_branch
      %1220 = sbr.rel (0) target = $region25
    $region24: #{tpu_custom_call.1} parent=1 // pred_region
      %s1222 = ssub.s32 2048, 2048
      %1223 = vsyncadd [#allocation4], %s1222
      %s1224 = sshll.u32 [#allocation7], 4
      %s1225 = int_to_ptr.vmem [resolvable:$true] %s1224
      %1230 = dma.vmem_to_hbm [thread:$0]  %s1225, 2048, %s3, [#allocation4], 64, 64, 4
    $region25: #{tpu_custom_call.1} parent=1 // pred_fallthru
      _
    // Predicated region
    $region26: #{tpu_custom_call.1} parent=1 // pred_check
      _
    $region27: #{tpu_custom_call.1} parent=1 // pred_check_branch
      %1232 = sbr.rel (0) target = $region29
    $region28: #{tpu_custom_call.1} parent=1 // pred_region
      %s1234 = ssub.s32 2048, 2048
      %1235 = vsyncadd [#allocation9], %s1234
      %s1236 = sshll.u32 [#allocation8], 4
      %s1237 = int_to_ptr.vmem [resolvable:$true] %s1236
      %1242 = dma.vmem_to_hbm [thread:$0]  %s1237, 2048, %s4, [#allocation9], 64, 64, 4
    $region29: #{tpu_custom_call.1} parent=1 // pred_fallthru
      _
    // Predicated region
    $region30: #{tpu_custom_call.1} parent=1 // pred_check
      _
    $region31: #{tpu_custom_call.1} parent=1 // pred_check_branch
      %1244 = sbr.rel (0) target = $region33
    $region32: #{tpu_custom_call.1} parent=1 // pred_region
      %s1246 = ssub.s32 2048, 2048
      %1247 = vsyncadd [#allocation9], %s1246
      %s1248 = sshll.u32 [#allocation10], 4
      %s1249 = int_to_ptr.vmem [resolvable:$true] %s1248
      %1254 = dma.vmem_to_hbm [thread:$0]  %s1249, 2048, %s5, [#allocation9], 64, 64, 4
    $region33: #{tpu_custom_call.1} parent=1 // pred_fallthru
      _
    // Predicated region
    $region34: #{tpu_custom_call.1} parent=1 // pred_check
      _
    $region35: #{tpu_custom_call.1} parent=1 // pred_check_branch
      %1256 = sbr.rel (0) target = $region37
    $region36: #{tpu_custom_call.1} parent=1 // pred_region
      %1257 = dma.done [#allocation4], 2048
    $region37: #{tpu_custom_call.1} parent=1 // pred_fallthru
      _
    // Predicated region
    $region38: #{tpu_custom_call.1} parent=1 // pred_check
      _
    $region39: #{tpu_custom_call.1} parent=1 // pred_check_branch
      %1259 = sbr.rel (0) target = $region41
    $region40: #{tpu_custom_call.1} parent=1 // pred_region
      %1260 = dma.done [#allocation9], 2048
    $region41: #{tpu_custom_call.1} parent=1 // pred_fallthru
      _
    // Predicated region
    $region42: #{tpu_custom_call.1} parent=1 // pred_check
      _
    $region43: #{tpu_custom_call.1} parent=1 // pred_check_branch
      %1262 = sbr.rel (0) target = $region45
    $region44: #{tpu_custom_call.1} parent=1 // pred_region
      %1263 = dma.done [#allocation9], 2048
    $region45: #{tpu_custom_call.1} parent=1 // pred_fallthru
      _
    %1264 = vsyncpa [#allocation3], 1
    %1265 = vsyncpa [#allocation6], 1
    %1266 = vsyncpa [#allocation4], 1
    %1267 = vsyncpa [#allocation9], 1

</llo_original>
